<compile_context>
chip_gen: v6e
topology: v6e:2x2x1
jax: 0.10.0
libtpu: 0.0.40
codegen_flags: <defaults>
</compile_context>

<pallas_src>
import functools

import jax
import jax.numpy as jnp
from jax.experimental import pallas as pl
from jax.experimental.pallas import tpu as pltpu

_LANE = 128  # TPU lane width; hidden and action dims are zero-padded to this.


def _policy_kernel(x_ref, w1_ref, w2_ref, w3_ref, b_ref, o_ref, *, action_dim):
    x = x_ref[...]
    b1 = b_ref[0:1, :]  # (1, 128) rows of the stacked bias block
    b2 = b_ref[1:2, :]
    b3 = b_ref[2:3, :]  # padded action lanes of b3 hold -1e30

    # fc1 + ReLU  (hidden padded to 128; padded columns are exactly zero)
    h1 = jnp.dot(x, w1_ref[...], preferred_element_type=jnp.float32) + b1
    h1 = jnp.maximum(h1, 0.0)

    # fc2 + ReLU
    h2 = jnp.dot(h1, w2_ref[...], preferred_element_type=jnp.float32) + b2
    h2 = jnp.maximum(h2, 0.0)

    # fc3 -> (bb, 128) logits; dead lanes are -1e30 via the b3 padding so no
    # explicit mask is needed (exp underflows to 0, row max comes from real lanes).
    logits = jnp.dot(h2, w3_ref[...], preferred_element_type=jnp.float32) + b3

    # Numerically-stable softmax with an EXACT divide so rows sum to 1.
    m = jnp.max(logits, axis=-1, keepdims=True)
    e = jnp.exp(logits - m)
    denom = jnp.sum(e, axis=-1, keepdims=True)
    probs = e / denom

    # Store only the real action lanes (block last dim == full array dim).
    o_ref[...] = probs[:, :action_dim].astype(o_ref.dtype)


def init_params(key, state_dim, action_dim, hidden=64):
    """Deterministic init mimicking PyTorch Linear default (uniform +-1/sqrt(fan_in))."""
    ks = jax.random.split(key, 6)

    def lin(kw, kb, fan_in, fan_out):
        bound = 1.0 / jnp.sqrt(fan_in)
        w = jax.random.uniform(kw, (fan_in, fan_out), jnp.float32, -bound, bound)
        b = jax.random.uniform(kb, (1, fan_out), jnp.float32, -bound, bound)
        return w, b

    w1, b1 = lin(ks[0], ks[1], state_dim, hidden)
    w2, b2 = lin(ks[2], ks[3], hidden, hidden)
    w3, b3 = lin(ks[4], ks[5], hidden, action_dim)
    return {"w1": w1, "b1": b1, "w2": w2, "b2": b2, "w3": w3, "b3": b3}


def pad_params(params):
    """Pad weights ONCE (hoisted out of the forward pass).

    - fc1 contraction dim padded to a multiple of 8 (sublane boundary).
    - hidden / action dims zero-padded to 128 (lane width).
    - b3's dead action lanes are padded with -1e30 so the in-kernel softmax
      needs no mask; b1/b2 padding is zero so padded hidden columns stay 0.
    - the three biases are stacked into one (3, 128) array (single DMA).
    """
    w1, b1 = params["w1"], params["b1"]
    w2, b2 = params["w2"], params["b2"]
    w3, b3 = params["w3"], params["b3"]

    state_dim, hidden = w1.shape
    action_dim = w3.shape[1]
    assert hidden <= _LANE and action_dim <= _LANE

    sp = ((state_dim + 7) // 8) * 8   # padded fc1 contraction dim
    hp = _LANE                        # padded hidden width
    ap = _LANE                        # padded action width (internal slab)

    w1p = jnp.pad(w1, ((0, sp - state_dim), (0, hp - hidden)))
    w2p = jnp.pad(w2, ((0, hp - hidden), (0, hp - hidden)))
    w3p = jnp.pad(w3, ((0, hp - hidden), (0, ap - action_dim)))
    b1p = jnp.pad(b1, ((0, 0), (0, hp - hidden)))
    b2p = jnp.pad(b2, ((0, 0), (0, hp - hidden)))
    b3p = jnp.pad(b3, ((0, 0), (0, ap - action_dim)), constant_values=-1e30)
    bias = jnp.concatenate([b1p, b2p, b3p], axis=0)  # (3, 128)

    return {
        "w1": w1p, "w2": w2p, "w3": w3p, "bias": bias,
        "state_dim": state_dim, "action_dim": action_dim,
    }


def policy_network_forward(x, padded, *, block_batch=2048):
    """x: (B, state_dim) float32.  `padded` comes from pad_params()."""
    B, state_dim = x.shape
    sp, hp = padded["w1"].shape
    ap = padded["w3"].shape[1]
    action_dim = padded["action_dim"]
    assert state_dim == padded["state_dim"]

    # Batch tile: fat steps amortize per-step overhead (v5e/v6e), but whenever
    # the padded batch has >= 2 sublane tiles, cap at ceil(Bp/2) so the
    # "parallel" grid has >= 2 steps and both v7x TensorCores see work.
    B8 = ((B + 7) // 8) * 8
    bb = max(8, min(block_batch, B8))
    if B8 >= 16:
        half = (((B8 + 1) // 2) + 7) // 8 * 8
        bb = min(bb, half)
    bb = ((bb + 7) // 8) * 8
    Bp = ((B + bb - 1) // bb) * bb

    xp = x
    if Bp != B or sp != state_dim:
        xp = jnp.pad(x, ((0, Bp - B), (0, sp - state_dim)))

    grid = (Bp // bb,)
    kernel = functools.partial(_policy_kernel, action_dim=action_dim)

    out = pl.pallas_call(
        kernel,
        out_shape=jax.ShapeDtypeStruct((Bp, action_dim), jnp.float32),
        grid_spec=pltpu.PrefetchScalarGridSpec(
            num_scalar_prefetch=0,
            grid=grid,
            in_specs=[
                pl.BlockSpec((bb, sp), lambda i: (i, 0)),   # x tile
                pl.BlockSpec((sp, hp), lambda i: (0, 0)),   # w1 (resident)
                pl.BlockSpec((hp, hp), lambda i: (0, 0)),   # w2 (resident)
                pl.BlockSpec((hp, ap), lambda i: (0, 0)),   # w3 (resident)
                pl.BlockSpec((3, hp), lambda i: (0, 0)),    # stacked biases
            ],
            out_specs=pl.BlockSpec((bb, action_dim), lambda i: (i, 0)),
        ),
        compiler_params=pltpu.CompilerParams(
            dimension_semantics=("parallel",),
            vmem_limit_bytes=32 * 1024 * 1024,  # headroom for fat batch tiles (v5e default is 16MiB)
        ),
    )(xp, padded["w1"], padded["w2"], padded["w3"], padded["bias"])

    # Only batch padding remains to strip; action lanes are already exact.
    return out[:B]


if __name__ == "__main__":
    state_dim, action_dim = 4, 2

    key = jax.random.PRNGKey(0)
    k_params, k_x1, k_x2 = jax.random.split(key, 3)
    params = init_params(k_params, state_dim, action_dim)
    padded = pad_params(params)  # pad once, reuse across every forward call

    # Pure-JAX reference for sanity.
    def ref(x, p):
        h = jnp.maximum(x @ p["w1"] + p["b1"], 0.0)
        h = jnp.maximum(h @ p["w2"] + p["b2"], 0.0)
        return jax.nn.softmax(h @ p["w3"] + p["b3"], axis=-1)

    # Primary small-shape run (batch=8) plus a ragged batch to exercise both
    # batch padding and a multi-step (>=2) grid.
    for bk, batch in ((k_x1, 8), (k_x2, 13)):
        x = jax.random.normal(bk, (batch, state_dim), jnp.float32)
        probs = jax.block_until_ready(policy_network_forward(x, padded))
        expected = ref(x, params)
        assert probs.shape == (batch, action_dim)
        assert jnp.allclose(probs, expected, atol=2e-3, rtol=2e-3)
        # Exact divide in the kernel -> rows sum to 1 to float32 rounding.
        assert jnp.allclose(jnp.sum(probs, axis=-1), 1.0, atol=1e-4)

    print("KERNEL_OK")
</pallas_src>

<mosaic_0001>
module attributes {stable_mosaic.version = 11 : i64} {
  func.func @_policy_kernel(%arg0: i32, %arg1: memref<8x8xf32, #tpu.memory_space<vmem>>, %arg2: memref<8x128xf32, #tpu.memory_space<vmem>>, %arg3: memref<128x128xf32, #tpu.memory_space<vmem>>, %arg4: memref<128x128xf32, #tpu.memory_space<vmem>>, %arg5: memref<3x128xf32, #tpu.memory_space<vmem>>, %arg6: memref<8x2xf32, #tpu.memory_space<vmem>>) attributes {dimension_semantics = [#tpu.dimension_semantics<parallel>], iteration_bounds = array<i64: 1>, scalar_prefetch = 0 : i64, scratch_operands = 0 : i64, tpu.core_type = #tpu.core_type<tc>, window_params = [{transform_indices = @transform_0, window_bounds = array<i64: 8, 8>}, {pipeline_mode = #tpu.pipeline_mode<synchronous>, transform_indices = @transform_1, window_bounds = array<i64: 8, 128>}, {pipeline_mode = #tpu.pipeline_mode<synchronous>, transform_indices = @transform_2, window_bounds = array<i64: 128, 128>}, {pipeline_mode = #tpu.pipeline_mode<synchronous>, transform_indices = @transform_3, window_bounds = array<i64: 128, 128>}, {pipeline_mode = #tpu.pipeline_mode<synchronous>, transform_indices = @transform_4, window_bounds = array<i64: 3, 128>}, {transform_indices = @transform_5, window_bounds = array<i64: 8, 2>}]} {
    %c0 = arith.constant 0 : index
    %c0_0 = arith.constant 0 : index
    %0 = vector.load %arg1[%c0, %c0_0] : memref<8x8xf32, #tpu.memory_space<vmem>>, vector<8x8xf32>
    %c0_1 = arith.constant 0 : index
    %c0_2 = arith.constant 0 : index
    %1 = vector.load %arg5[%c0_1, %c0_2] : memref<3x128xf32, #tpu.memory_space<vmem>>, vector<1x128xf32>
    %c1 = arith.constant 1 : index
    %c0_3 = arith.constant 0 : index
    %2 = vector.load %arg5[%c1, %c0_3] : memref<3x128xf32, #tpu.memory_space<vmem>>, vector<1x128xf32>
    %c2 = arith.constant 2 : index
    %c0_4 = arith.constant 0 : index
    %3 = vector.load %arg5[%c2, %c0_4] : memref<3x128xf32, #tpu.memory_space<vmem>>, vector<1x128xf32>
    %c0_5 = arith.constant 0 : index
    %c0_6 = arith.constant 0 : index
    %4 = vector.load %arg2[%c0_5, %c0_6] : memref<8x128xf32, #tpu.memory_space<vmem>>, vector<8x128xf32>
    %cst = arith.constant dense<0.000000e+00> : vector<8x128xf32>
    %5 = tpu.matmul %0, %4, %cst {dimension_numbers = #tpu.dot_dimension_numbers<[1], [0], [0], [1], [0, 0, 1, 1], [], []>} : vector<8x8xf32>, vector<8x128xf32>, vector<8x128xf32> -> vector<8x128xf32>
    %6 = vector.broadcast %1 : vector<1x128xf32> to vector<8x128xf32>
    %7 = arith.addf %5, %6 : vector<8x128xf32>
    %cst_7 = arith.constant 0.000000e+00 : f32
    %8 = vector.broadcast %cst_7 : f32 to vector<8x128xf32>
    %9 = arith.maximumf %7, %8 : vector<8x128xf32>
    %c0_8 = arith.constant 0 : index
    %c0_9 = arith.constant 0 : index
    %10 = vector.load %arg3[%c0_8, %c0_9] : memref<128x128xf32, #tpu.memory_space<vmem>>, vector<128x128xf32>
    %cst_10 = arith.constant dense<0.000000e+00> : vector<8x128xf32>
    %11 = tpu.matmul %9, %10, %cst_10 {dimension_numbers = #tpu.dot_dimension_numbers<[1], [0], [0], [1], [0, 0, 1, 1], [], []>} : vector<8x128xf32>, vector<128x128xf32>, vector<8x128xf32> -> vector<8x128xf32>
    %12 = vector.broadcast %2 : vector<1x128xf32> to vector<8x128xf32>
    %13 = arith.addf %11, %12 : vector<8x128xf32>
    %cst_11 = arith.constant 0.000000e+00 : f32
    %14 = vector.broadcast %cst_11 : f32 to vector<8x128xf32>
    %15 = arith.maximumf %13, %14 : vector<8x128xf32>
    %c0_12 = arith.constant 0 : index
    %c0_13 = arith.constant 0 : index
    %16 = vector.load %arg4[%c0_12, %c0_13] : memref<128x128xf32, #tpu.memory_space<vmem>>, vector<128x128xf32>
    %cst_14 = arith.constant dense<0.000000e+00> : vector<8x128xf32>
    %17 = tpu.matmul %15, %16, %cst_14 {dimension_numbers = #tpu.dot_dimension_numbers<[1], [0], [0], [1], [0, 0, 1, 1], [], []>} : vector<8x128xf32>, vector<128x128xf32>, vector<8x128xf32> -> vector<8x128xf32>
    %18 = vector.broadcast %3 : vector<1x128xf32> to vector<8x128xf32>
    %19 = arith.addf %17, %18 : vector<8x128xf32>
    %cst_15 = arith.constant dense<0xFF800000> : vector<8xf32>
    %20 = vector.multi_reduction <maximumf>, %19, %cst_15 [1] : vector<8x128xf32> to vector<8xf32>
    %21 = vector.shape_cast %20 : vector<8xf32> to vector<8x1xf32>
    %22 = vector.broadcast %21 : vector<8x1xf32> to vector<8x128xf32>
    %23 = arith.subf %19, %22 : vector<8x128xf32>
    %24 = math.exp %23 : vector<8x128xf32>
    %cst_16 = arith.constant dense<0.000000e+00> : vector<8xf32>
    %25 = vector.multi_reduction <add>, %24, %cst_16 [1] : vector<8x128xf32> to vector<8xf32>
    %26 = vector.shape_cast %25 : vector<8xf32> to vector<8x1xf32>
    %27 = vector.broadcast %26 : vector<8x1xf32> to vector<8x128xf32>
    %28 = arith.divf %24, %27 : vector<8x128xf32>
    %29 = vector.extract_strided_slice %28 {offsets = [0, 0], sizes = [8, 2], strides = [1, 1]} : vector<8x128xf32> to vector<8x2xf32>
    %c0_17 = arith.constant 0 : index
    %c0_18 = arith.constant 0 : index
    %30 = vector.load %arg6[%c0_17, %c0_18] : memref<8x2xf32, #tpu.memory_space<vmem>>, vector<8x2xf32>
    tpu.vector_store %arg6[%c0_17, %c0_18], %29 {strides = array<i32>} : memref<8x2xf32, #tpu.memory_space<vmem>>, vector<8x2xf32>,
    return
  }
  func.func @transform_0(%arg0: i32) -> (i32, i32) {
    %c0_i32 = arith.constant 0 : i32
    %c0_i32_0 = arith.constant 0 : i32
    return %arg0, %c0_i32 : i32, i32
  }
  func.func @transform_1(%arg0: i32) -> (i32, i32) {
    %c0_i32 = arith.constant 0 : i32
    %c0_i32_0 = arith.constant 0 : i32
    %c0_i32_1 = arith.constant 0 : i32
    return %c0_i32, %c0_i32_0 : i32, i32
  }
  func.func @transform_2(%arg0: i32) -> (i32, i32) {
    %c0_i32 = arith.constant 0 : i32
    %c0_i32_0 = arith.constant 0 : i32
    %c0_i32_1 = arith.constant 0 : i32
    return %c0_i32, %c0_i32_0 : i32, i32
  }
  func.func @transform_3(%arg0: i32) -> (i32, i32) {
    %c0_i32 = arith.constant 0 : i32
    %c0_i32_0 = arith.constant 0 : i32
    %c0_i32_1 = arith.constant 0 : i32
    return %c0_i32, %c0_i32_0 : i32, i32
  }
  func.func @transform_4(%arg0: i32) -> (i32, i32) {
    %c0_i32 = arith.constant 0 : i32
    %c0_i32_0 = arith.constant 0 : i32
    %c0_i32_1 = arith.constant 0 : i32
    return %c0_i32, %c0_i32_0 : i32, i32
  }
  func.func @transform_5(%arg0: i32) -> (i32, i32) {
    %c0_i32 = arith.constant 0 : i32
    %c0_i32_0 = arith.constant 0 : i32
    return %arg0, %c0_i32 : i32, i32
  }
}

</mosaic_0001>

<llo_original>
// kernel: tpu_custom_call.1
$region0: #{tpu_custom_call.1}
  #allocation0 [shape = 'u32[]', space=smem, size = 0x4, offset = 0x4, fixed_abs, tag = 'smem constant byte address 0x4 - core index']
  #allocation1 [shape = 'u32[144,128]{1,0:T(1,128)}', space=vmem, size = 0x12000, scoped, tag = 'internal scratch']
  %s0 = inlined_call_operand.hbm [shape: f32[8,8], index: 0, kind: input, shape index: {}]
  %s1 = inlined_call_operand.hbm [shape: f32[8,128], index: 1, kind: input, shape index: {}]
  %s2 = inlined_call_operand.hbm [shape: f32[128,128], index: 2, kind: input, shape index: {}]
  %s3 = inlined_call_operand.hbm [shape: f32[128,128], index: 3, kind: input, shape index: {}]
  %s4 = inlined_call_operand.vmem [shape: f32[3,128], index: 4, kind: input, shape index: {}]
  %s5 = inlined_call_operand.vmem [shape: f32[8,2], index: 5, kind: output, shape index: {}]
  %s6 = sld [smem:[#allocation0]]
  $region46: #{tpu_custom_call.1} parent=0
    _
  %s8 = ssub.s32 1, %s6
  %s9 = scalar_select 0, %s8, %s6
  $region1: #{tpu_custom_call.1} parent=0
    #allocation2 [shape = 'u8[4096]{0}', space=vmem, size = 0x1000, scoped, tag = 'input window, operand 0, single buffered']
    #allocation3 [shape = 's32[1]{0}', space=sflag, size = 0x4, scoped, tag = 'scoped memory for tpu_custom_call.1']
    #allocation4 [shape = 'u8[4096]{0}', space=vmem, size = 0x1000, scoped, tag = 'input window, operand 1, single buffered']
    #allocation5 [shape = 's32[1]{0}', space=sflag, size = 0x4, scoped, tag = 'scoped memory for tpu_custom_call.1']
    #allocation6 [shape = 'u8[65536]{0}', space=vmem, size = 0x10000, scoped, tag = 'input window, operand 2, single buffered']
    #allocation7 [shape = 'u8[65536]{0}', space=vmem, size = 0x10000, scoped, tag = 'input window, operand 3, single buffered']
    #allocation8 [shape = 's32[1]{0}', space=sflag, size = 0x4, scoped, tag = 'scoped memory for tpu_custom_call.1']
    %10 = vsyncpa [#allocation3], 0
    %11 = vsyncpa [#allocation5], 0
    %12 = vsyncpa [#allocation8], 0
    // Predicated region
    $region2: #{tpu_custom_call.1} parent=1 // pred_check
      _
    $region3: #{tpu_custom_call.1} parent=1 // pred_check_branch
      %14 = sbr.rel (0) target = $region5
    $region4: #{tpu_custom_call.1} parent=1 // pred_region
      %s16 = ssub.s32 128, 128
      %17 = vsyncadd [#allocation3], %s16
      %s19 = sshll.u32 [#allocation2], 4
      %s20 = int_to_ptr.vmem [resolvable:$true] %s19
      %22 = dma.hbm_to_vmem [thread:$0]  %s0, 128, %s20, [#allocation3]
    $region5: #{tpu_custom_call.1} parent=1 // pred_fallthru
      _
    // Predicated region
    $region6: #{tpu_custom_call.1} parent=1 // pred_check
      _
    $region7: #{tpu_custom_call.1} parent=1 // pred_check_branch
      %24 = sbr.rel (0) target = $region9
    $region8: #{tpu_custom_call.1} parent=1 // pred_region
      %s26 = ssub.s32 128, 128
      %27 = vsyncadd [#allocation5], %s26
      %s29 = sshll.u32 [#allocation4], 4
      %s30 = int_to_ptr.vmem [resolvable:$true] %s29
      %32 = dma.hbm_to_vmem [thread:$0]  %s1, 128, %s30, [#allocation5]
    $region9: #{tpu_custom_call.1} parent=1 // pred_fallthru
      _
    // Predicated region
    $region10: #{tpu_custom_call.1} parent=1 // pred_check
      _
    $region11: #{tpu_custom_call.1} parent=1 // pred_check_branch
      %34 = sbr.rel (0) target = $region13
    $region12: #{tpu_custom_call.1} parent=1 // pred_region
      %s36 = ssub.s32 2048, 2048
      %37 = vsyncadd [#allocation5], %s36
      %s38 = sshll.u32 [#allocation6], 4
      %s39 = int_to_ptr.vmem [resolvable:$true] %s38
      %44 = dma.hbm_to_vmem [thread:$0]  %s2, 2048, %s39, [#allocation5], 128, 128, 8
    $region13: #{tpu_custom_call.1} parent=1 // pred_fallthru
      _
    // Predicated region
    $region14: #{tpu_custom_call.1} parent=1 // pred_check
      _
    $region15: #{tpu_custom_call.1} parent=1 // pred_check_branch
      %46 = sbr.rel (0) target = $region17
    $region16: #{tpu_custom_call.1} parent=1 // pred_region
      %s48 = ssub.s32 2048, 2048
      %49 = vsyncadd [#allocation8], %s48
      %s50 = sshll.u32 [#allocation7], 4
      %s51 = int_to_ptr.vmem [resolvable:$true] %s50
      %56 = dma.hbm_to_vmem [thread:$0]  %s3, 2048, %s51, [#allocation8], 128, 128, 8
    $region17: #{tpu_custom_call.1} parent=1 // pred_fallthru
      _
    // Predicated region
    $region18: #{tpu_custom_call.1} parent=1 // pred_check
      _
    $region19: #{tpu_custom_call.1} parent=1 // pred_check_branch
      %58 = sbr.rel (0) target = $region21
    $region20: #{tpu_custom_call.1} parent=1 // pred_region
      _
    $region21: #{tpu_custom_call.1} parent=1 // pred_fallthru
      _
    // Predicated region
    $region22: #{tpu_custom_call.1} parent=1 // pred_check
      _
    $region23: #{tpu_custom_call.1} parent=1 // pred_check_branch
      %60 = sbr.rel (0) target = $region25
    $region24: #{tpu_custom_call.1} parent=1 // pred_region
      %61 = dma.done [#allocation3], 128
    $region25: #{tpu_custom_call.1} parent=1 // pred_fallthru
      _
    // Predicated region
    $region26: #{tpu_custom_call.1} parent=1 // pred_check
      _
    $region27: #{tpu_custom_call.1} parent=1 // pred_check_branch
      %63 = sbr.rel (0) target = $region29
    $region28: #{tpu_custom_call.1} parent=1 // pred_region
      %64 = dma.done [#allocation5], 128
    $region29: #{tpu_custom_call.1} parent=1 // pred_fallthru
      _
    // Predicated region
    $region30: #{tpu_custom_call.1} parent=1 // pred_check
      _
    $region31: #{tpu_custom_call.1} parent=1 // pred_check_branch
      %66 = sbr.rel (0) target = $region33
    $region32: #{tpu_custom_call.1} parent=1 // pred_region
      %67 = dma.done [#allocation5], 2048
    $region33: #{tpu_custom_call.1} parent=1 // pred_fallthru
      _
    // Predicated region
    $region34: #{tpu_custom_call.1} parent=1 // pred_check
      _
    $region35: #{tpu_custom_call.1} parent=1 // pred_check_branch
      %69 = sbr.rel (0) target = $region37
    $region36: #{tpu_custom_call.1} parent=1 // pred_region
      %70 = dma.done [#allocation8], 2048
    $region37: #{tpu_custom_call.1} parent=1 // pred_fallthru
      _
    %v71 = vld [vmem:[#allocation2] sm:$0xff]
    %v72 = vld [vmem:[%s4] sm:$0x1]
    %v73 = vld [vmem:[%s4 + $0x1] sm:$0x1]
    %v74 = vld [vmem:[%s4 + $0x2] sm:$0x1]
    %v75 = vld [vmem:[#allocation4] sm:$0xff]
    %v76 = vlaneseq
    %v77 = vshrl.u32 %v76, 7
    %v78 = vsub.s32 0, %v77
    %v79 = vrot.slane %v72, %v78
    %vm80 = vcmask 64512
    %v82 = vsel %vm80, %v71, 0
    %84 = vmatprep.subr.mxu0 0.0
    %85 = vmatpush1.msra.mxu0 0.0
    %86 = vmatprep.subr.mxu0 0.0
    %87 = vmatpush1.msra.mxu0 0.0
    %88 = vmatprep.subr.mxu0 0.0
    %89 = vmatpush1.msra.mxu0 0.0
    %90 = vmatprep.subr.mxu0 0.0
    %91 = vmatpush1.msra.mxu0 0.0
    %92 = vmatprep.subr.mxu0 0.0
    %93 = vmatpush1.msra.mxu0 0.0
    %94 = vmatprep.subr.mxu0 0.0
    %95 = vmatpush1.msra.mxu0 0.0
    %96 = vmatprep.subr.mxu0 0.0
    %97 = vmatpush1.msra.mxu0 0.0
    %98 = vmatprep.subr.mxu0 0.0
    %99 = vmatpush1.msra.mxu0 0.0
    %100 = vmatprep.subr.mxu0 0.0
    %101 = vmatpush1.msra.mxu0 0.0
    %102 = vmatprep.subr.mxu0 0.0
    %103 = vmatpush1.msra.mxu0 0.0
    %104 = vmatprep.subr.mxu0 0.0
    %105 = vmatpush1.msra.mxu0 0.0
    %106 = vmatprep.subr.mxu0 0.0
    %107 = vmatpush1.msra.mxu0 0.0
    %108 = vmatprep.subr.mxu0 0.0
    %109 = vmatpush1.msra.mxu0 0.0
    %110 = vmatprep.subr.mxu0 0.0
    %111 = vmatpush1.msra.mxu0 0.0
    %112 = vmatprep.subr.mxu0 0.0
    %113 = vmatpush1.msra.mxu0 0.0
    %114 = vmatprep.subr.mxu0 0.0
    %115 = vmatpush1.msra.mxu0 %v75
    %116 = vmatprep.subr.mxu0 0.0
    %117 = vmatpush2.msra.mxu0 0.0
    %118 = vmatprep.subr.mxu0 0.0
    %119 = vmatpush2.msra.mxu0 0.0
    %120 = vmatprep.subr.mxu0 0.0
    %121 = vmatpush2.msra.mxu0 0.0
    %122 = vmatprep.subr.mxu0 0.0
    %123 = vmatpush2.msra.mxu0 0.0
    %124 = vmatprep.subr.mxu0 0.0
    %125 = vmatpush2.msra.mxu0 0.0
    %126 = vmatprep.subr.mxu0 0.0
    %127 = vmatpush2.msra.mxu0 0.0
    %128 = vmatprep.subr.mxu0 0.0
    %129 = vmatpush2.msra.mxu0 0.0
    %130 = vmatprep.subr.mxu0 0.0
    %131 = vmatpush2.msra.mxu0 0.0
    %132 = vmatprep.subr.mxu0 0.0
    %133 = vmatpush2.msra.mxu0 0.0
    %134 = vmatprep.subr.mxu0 0.0
    %135 = vmatpush2.msra.mxu0 0.0
    %136 = vmatprep.subr.mxu0 0.0
    %137 = vmatpush2.msra.mxu0 0.0
    %138 = vmatprep.subr.mxu0 0.0
    %139 = vmatpush2.msra.mxu0 0.0
    %140 = vmatprep.subr.mxu0 0.0
    %141 = vmatpush2.msra.mxu0 0.0
    %142 = vmatprep.subr.mxu0 0.0
    %143 = vmatpush2.msra.mxu0 0.0
    %144 = vmatprep.subr.mxu0 0.0
    %145 = vmatpush2.msra.mxu0 0.0
    %146 = vmatprep.subr.mxu0 0.0
    %147 = vmatpush2.msra.mxu0 0.0
    %148 = vmatprep.mubr.f32.mxu0 0.0
    %149 = vmatmul.mubr.f32.gmra.mxu0 %v82
    %v150 = vpop.f32.mrf.mxu0
    %v151 = vadd.f32 %v79, %v150
    %v152 = vpop.f32.mrf.mxu0
    %153 = vdwg.mxu0
    %v154 = vmax.f32 %v151, 0.0
    %v155 = vld [vmem:[#allocation6] sm:$0xff]
    %v156 = vld [vmem:[#allocation6 + $0x8] sm:$0xff]
    %v157 = vld [vmem:[#allocation6 + $0x10] sm:$0xff]
    %v158 = vld [vmem:[#allocation6 + $0x18] sm:$0xff]
    %v159 = vld [vmem:[#allocation6 + $0x20] sm:$0xff]
    %v160 = vld [vmem:[#allocation6 + $0x28] sm:$0xff]
    %v161 = vld [vmem:[#allocation6 + $0x30] sm:$0xff]
    %v162 = vld [vmem:[#allocation6 + $0x38] sm:$0xff]
    %v163 = vld [vmem:[#allocation6 + $0x40] sm:$0xff]
    %v164 = vld [vmem:[#allocation6 + $0x48] sm:$0xff]
    %v165 = vld [vmem:[#allocation6 + $0x50] sm:$0xff]
    %v166 = vld [vmem:[#allocation6 + $0x58] sm:$0xff]
    %v167 = vld [vmem:[#allocation6 + $0x60] sm:$0xff]
    %v168 = vld [vmem:[#allocation6 + $0x68] sm:$0xff]
    %v169 = vld [vmem:[#allocation6 + $0x70] sm:$0xff]
    %v170 = vld [vmem:[#allocation6 + $0x78] sm:$0xff]
    %v171 = vlaneseq
    %v172 = vshrl.u32 %v171, 7
    %v173 = vsub.s32 0, %v172
    %v174 = vrot.slane %v73, %v173
    %175 = vmatprep.subr.mxu0 0.0
    %176 = vmatpush1.msra.mxu0 %v170
    %177 = vmatprep.subr.mxu0 0.0
    %178 = vmatpush1.msra.mxu0 %v169
    %179 = vmatprep.subr.mxu0 0.0
    %180 = vmatpush1.msra.mxu0 %v168
    %181 = vmatprep.subr.mxu0 0.0
    %182 = vmatpush1.msra.mxu0 %v167
    %183 = vmatprep.subr.mxu0 0.0
    %184 = vmatpush1.msra.mxu0 %v166
    %185 = vmatprep.subr.mxu0 0.0
    %186 = vmatpush1.msra.mxu0 %v165
    %187 = vmatprep.subr.mxu0 0.0
    %188 = vmatpush1.msra.mxu0 %v164
    %189 = vmatprep.subr.mxu0 0.0
    %190 = vmatpush1.msra.mxu0 %v163
    %191 = vmatprep.subr.mxu0 0.0
    %192 = vmatpush1.msra.mxu0 %v162
    %193 = vmatprep.subr.mxu0 0.0
    %194 = vmatpush1.msra.mxu0 %v161
    %195 = vmatprep.subr.mxu0 0.0
    %196 = vmatpush1.msra.mxu0 %v160
    %197 = vmatprep.subr.mxu0 0.0
    %198 = vmatpush1.msra.mxu0 %v159
    %199 = vmatprep.subr.mxu0 0.0
    %200 = vmatpush1.msra.mxu0 %v158
    %201 = vmatprep.subr.mxu0 0.0
    %202 = vmatpush1.msra.mxu0 %v157
    %203 = vmatprep.subr.mxu0 0.0
    %204 = vmatpush1.msra.mxu0 %v156
    %205 = vmatprep.subr.mxu0 0.0
    %206 = vmatpush1.msra.mxu0 %v155
    %207 = vmatprep.subr.mxu0 0.0
    %208 = vmatpush2.msra.mxu0 0.0
    %209 = vmatprep.subr.mxu0 0.0
    %210 = vmatpush2.msra.mxu0 0.0
    %211 = vmatprep.subr.mxu0 0.0
    %212 = vmatpush2.msra.mxu0 0.0
    %213 = vmatprep.subr.mxu0 0.0
    %214 = vmatpush2.msra.mxu0 0.0
    %215 = vmatprep.subr.mxu0 0.0
    %216 = vmatpush2.msra.mxu0 0.0
    %217 = vmatprep.subr.mxu0 0.0
    %218 = vmatpush2.msra.mxu0 0.0
    %219 = vmatprep.subr.mxu0 0.0
    %220 = vmatpush2.msra.mxu0 0.0
    %221 = vmatprep.subr.mxu0 0.0
    %222 = vmatpush2.msra.mxu0 0.0
    %223 = vmatprep.subr.mxu0 0.0
    %224 = vmatpush2.msra.mxu0 0.0
    %225 = vmatprep.subr.mxu0 0.0
    %226 = vmatpush2.msra.mxu0 0.0
    %227 = vmatprep.subr.mxu0 0.0
    %228 = vmatpush2.msra.mxu0 0.0
    %229 = vmatprep.subr.mxu0 0.0
    %230 = vmatpush2.msra.mxu0 0.0
    %231 = vmatprep.subr.mxu0 0.0
    %232 = vmatpush2.msra.mxu0 0.0
    %233 = vmatprep.subr.mxu0 0.0
    %234 = vmatpush2.msra.mxu0 0.0
    %235 = vmatprep.subr.mxu0 0.0
    %236 = vmatpush2.msra.mxu0 0.0
    %237 = vmatprep.subr.mxu0 0.0
    %238 = vmatpush2.msra.mxu0 0.0
    %239 = vmatprep.mubr.f32.mxu0 0.0
    %240 = vmatmul.mubr.f32.gmra.mxu0 %v154
    %v241 = vpop.f32.mrf.mxu0
    %v242 = vadd.f32 %v174, %v241
    %v243 = vpop.f32.mrf.mxu0
    %244 = vdwg.mxu0
    %v245 = vmax.f32 %v242, 0.0
    %v246 = vld [vmem:[#allocation7] sm:$0xff]
    %v247 = vld [vmem:[#allocation7 + $0x8] sm:$0xff]
    %v248 = vld [vmem:[#allocation7 + $0x10] sm:$0xff]
    %v249 = vld [vmem:[#allocation7 + $0x18] sm:$0xff]
    %v250 = vld [vmem:[#allocation7 + $0x20] sm:$0xff]
    %v251 = vld [vmem:[#allocation7 + $0x28] sm:$0xff]
    %v252 = vld [vmem:[#allocation7 + $0x30] sm:$0xff]
    %v253 = vld [vmem:[#allocation7 + $0x38] sm:$0xff]
    %v254 = vld [vmem:[#allocation7 + $0x40] sm:$0xff]
    %v255 = vld [vmem:[#allocation7 + $0x48] sm:$0xff]
    %v256 = vld [vmem:[#allocation7 + $0x50] sm:$0xff]
    %v257 = vld [vmem:[#allocation7 + $0x58] sm:$0xff]
    %v258 = vld [vmem:[#allocation7 + $0x60] sm:$0xff]
    %v259 = vld [vmem:[#allocation7 + $0x68] sm:$0xff]
    %v260 = vld [vmem:[#allocation7 + $0x70] sm:$0xff]
    %v261 = vld [vmem:[#allocation7 + $0x78] sm:$0xff]
    %v262 = vlaneseq
    %v263 = vshrl.u32 %v262, 7
    %v264 = vsub.s32 0, %v263
    %v265 = vrot.slane %v74, %v264
    %266 = vmatprep.subr.mxu0 0.0
    %267 = vmatpush1.msra.mxu0 %v261
    %268 = vmatprep.subr.mxu0 0.0
    %269 = vmatpush1.msra.mxu0 %v260
    %270 = vmatprep.subr.mxu0 0.0
    %271 = vmatpush1.msra.mxu0 %v259
    %272 = vmatprep.subr.mxu0 0.0
    %273 = vmatpush1.msra.mxu0 %v258
    %274 = vmatprep.subr.mxu0 0.0
    %275 = vmatpush1.msra.mxu0 %v257
    %276 = vmatprep.subr.mxu0 0.0
    %277 = vmatpush1.msra.mxu0 %v256
    %278 = vmatprep.subr.mxu0 0.0
    %279 = vmatpush1.msra.mxu0 %v255
    %280 = vmatprep.subr.mxu0 0.0
    %281 = vmatpush1.msra.mxu0 %v254
    %282 = vmatprep.subr.mxu0 0.0
    %283 = vmatpush1.msra.mxu0 %v253
    %284 = vmatprep.subr.mxu0 0.0
    %285 = vmatpush1.msra.mxu0 %v252
    %286 = vmatprep.subr.mxu0 0.0
    %287 = vmatpush1.msra.mxu0 %v251
    %288 = vmatprep.subr.mxu0 0.0
    %289 = vmatpush1.msra.mxu0 %v250
    %290 = vmatprep.subr.mxu0 0.0
    %291 = vmatpush1.msra.mxu0 %v249
    %292 = vmatprep.subr.mxu0 0.0
    %293 = vmatpush1.msra.mxu0 %v248
    %294 = vmatprep.subr.mxu0 0.0
    %295 = vmatpush1.msra.mxu0 %v247
    %296 = vmatprep.subr.mxu0 0.0
    %297 = vmatpush1.msra.mxu0 %v246
    %298 = vmatprep.subr.mxu0 0.0
    %299 = vmatpush2.msra.mxu0 0.0
    %300 = vmatprep.subr.mxu0 0.0
    %301 = vmatpush2.msra.mxu0 0.0
    %302 = vmatprep.subr.mxu0 0.0
    %303 = vmatpush2.msra.mxu0 0.0
    %304 = vmatprep.subr.mxu0 0.0
    %305 = vmatpush2.msra.mxu0 0.0
    %306 = vmatprep.subr.mxu0 0.0
    %307 = vmatpush2.msra.mxu0 0.0
    %308 = vmatprep.subr.mxu0 0.0
    %309 = vmatpush2.msra.mxu0 0.0
    %310 = vmatprep.subr.mxu0 0.0
    %311 = vmatpush2.msra.mxu0 0.0
    %312 = vmatprep.subr.mxu0 0.0
    %313 = vmatpush2.msra.mxu0 0.0
    %314 = vmatprep.subr.mxu0 0.0
    %315 = vmatpush2.msra.mxu0 0.0
    %316 = vmatprep.subr.mxu0 0.0
    %317 = vmatpush2.msra.mxu0 0.0
    %318 = vmatprep.subr.mxu0 0.0
    %319 = vmatpush2.msra.mxu0 0.0
    %320 = vmatprep.subr.mxu0 0.0
    %321 = vmatpush2.msra.mxu0 0.0
    %322 = vmatprep.subr.mxu0 0.0
    %323 = vmatpush2.msra.mxu0 0.0
    %324 = vmatprep.subr.mxu0 0.0
    %325 = vmatpush2.msra.mxu0 0.0
    %326 = vmatprep.subr.mxu0 0.0
    %327 = vmatpush2.msra.mxu0 0.0
    %328 = vmatprep.subr.mxu0 0.0
    %329 = vmatpush2.msra.mxu0 0.0
    %330 = vmatprep.mubr.f32.mxu0 0.0
    %331 = vmatmul.mubr.f32.gmra.mxu0 %v245
    %v332 = vpop.f32.mrf.mxu0
    %v333 = vadd.f32 %v265, %v332
    %v334 = vpop.f32.mrf.mxu0
    %335 = vdwg.mxu0
    %336 = vmax.xlane.f32.xlu0 %v333
    %v337 = vpop.xlane.xlu0 %336
    %v338 = vsub.f32 %v333, %v337
    %v339 = vmul.f32 %v338, 1.442695
    %v340 = vpow.pop %v339
    %341 = vadd.xlane.f32.xlu0 %v340
    %v342 = vpop.xlane.xlu0 %341
    %v343 = vrcp.pop %v342
    %v344 = vmul.f32 %v340, %v343
    %vm345 = vcmask 15360
    %346 = vst.msk [vmem:[%s5] sm:$0xff] %vm345, %v344
    // Predicated region
    $region38: #{tpu_custom_call.1} parent=1 // pred_check
      _
    $region39: #{tpu_custom_call.1} parent=1 // pred_check_branch
      %348 = sbr.rel (0) target = $region41
    $region40: #{tpu_custom_call.1} parent=1 // pred_region
      _
    $region41: #{tpu_custom_call.1} parent=1 // pred_fallthru
      _
    // Predicated region
    $region42: #{tpu_custom_call.1} parent=1 // pred_check
      _
    $region43: #{tpu_custom_call.1} parent=1 // pred_check_branch
      %350 = sbr.rel (0) target = $region45
    $region44: #{tpu_custom_call.1} parent=1 // pred_region
      _
    $region45: #{tpu_custom_call.1} parent=1 // pred_fallthru
      _
    %351 = vsyncpa [#allocation3], 1
    %352 = vsyncpa [#allocation5], 1
    %353 = vsyncpa [#allocation8], 1

</llo_original>
